<compile_context>
chip_gen: v5e
topology: v5e:2x2
jax: 0.10.0
libtpu: 0.0.40
codegen_flags: <defaults>
</compile_context>

<pallas_src>
import functools
import math

import jax
import jax.numpy as jnp
from jax.experimental import pallas as pl
from jax.experimental.pallas import tpu as pltpu

HIDDEN = 256


def _critic_fused_kernel(obs_ref, act_ref, w1s_ref, w1a_ref, b1_ref,
                         w2_ref, b2_ref, w3_ref, b3_ref, q_ref,
                         *, n_critics, hidden):
    # obs_ref : (Bt, S)            act_ref : (Bt, A)
    # w1s_ref : (S, n*H)           w1a_ref : (A, n*H)      b1_ref : (1, n*H)
    # w2_ref  : (n, H, H)          b2_ref  : (n, 1, H)
    # w3_ref  : (n, 1, H)          b3_ref  : (n, 1, 1)
    # q_ref   : (Bt, n)

    # Layer 1: both critics fused along the output (N) axis -> one wide MXU
    # pass; obs/actions contracted separately (no concatenated input needed).
    h1 = jnp.dot(obs_ref[...], w1s_ref[...], preferred_element_type=jnp.float32)
    h1 = h1 + jnp.dot(act_ref[...], w1a_ref[...], preferred_element_type=jnp.float32)
    h1 = jnp.maximum(h1 + b1_ref[...], 0.0)            # ReLU in f32 (v5e-safe)

    bt = q_ref.shape[0]
    col = jax.lax.broadcasted_iota(jnp.int32, (1, n_critics), 1)
    q = jnp.zeros((bt, n_critics), jnp.float32)
    for c in range(n_critics):                          # unrolled at trace time
        h1_c = h1[:, c * hidden:(c + 1) * hidden].astype(w2_ref.dtype)
        h2 = jnp.dot(h1_c, w2_ref[c], preferred_element_type=jnp.float32)
        h2 = jnp.maximum(h2 + b2_ref[c], 0.0)
        # Head (256 -> 1): VPU multiply + lane (XLU) reduction instead of an
        # N=1 MXU matmul -- frees the MXU / avoids a single-column drain.
        qc = jnp.sum(h2 * w3_ref[c], axis=-1, keepdims=True) + b3_ref[c]  # (Bt, 1)
        q = q + jnp.where(col == c, qc, 0.0)            # place into lane c
    q_ref[...] = q.astype(q_ref.dtype)                  # single lane-packed store


def _critic_q_values(obs, actions, params, *, compute_dtype=jnp.float32,
                     batch_block=256):
    """Runs the fused kernel; returns q_all of shape [B, n_critics] (f32)."""
    if obs.ndim == 3:                                   # nn.Flatten(1, -1)
        obs = obs.reshape(obs.shape[0], -1)
    obs = obs.astype(jnp.float32)
    actions = actions.astype(jnp.float32)

    w1, b1, w2, b2, w3, b3 = params                     # stacked over n_critics
    n, D, H = w1.shape
    B, S = obs.shape
    A = actions.shape[1]
    assert D == S + A, "state_dim + action_dim mismatch with W1"

    # Fuse the n critics' first layers along N; split rows into obs / action
    # parts so no host-side concat of the inputs is required.
    w1f = jnp.transpose(w1, (1, 0, 2)).reshape(D, n * H)
    w1s = w1f[:S].astype(compute_dtype)
    w1a = w1f[S:].astype(compute_dtype)
    b1f = b1.reshape(1, n * H).astype(jnp.float32)
    w2c = w2.astype(compute_dtype)                      # (n, H, H)
    b2c = b2.astype(jnp.float32)                        # (n, 1, H)
    w3v = jnp.transpose(w3, (0, 2, 1)).astype(jnp.float32)  # (n, 1, H) head vectors
    b3c = b3.astype(jnp.float32)                        # (n, 1, 1)

    obs_c = obs.astype(compute_dtype)
    act_c = actions.astype(compute_dtype)

    bt = B if B <= batch_block else batch_block         # batch tile
    nb = pl.cdiv(B, bt)

    kernel = functools.partial(_critic_fused_kernel, n_critics=n, hidden=H)

    q_all = pl.pallas_call(
        kernel,
        out_shape=jax.ShapeDtypeStruct((B, n), jnp.float32),
        grid_spec=pltpu.PrefetchScalarGridSpec(
            num_scalar_prefetch=0,
            grid=(nb,),
            in_specs=[
                pl.BlockSpec((bt, S), lambda i: (i, 0)),        # obs tile
                pl.BlockSpec((bt, A), lambda i: (i, 0)),        # actions tile
                pl.BlockSpec((S, n * H), lambda i: (0, 0)),     # W1 (obs rows), resident
                pl.BlockSpec((A, n * H), lambda i: (0, 0)),     # W1 (action rows), resident
                pl.BlockSpec((1, n * H), lambda i: (0, 0)),     # b1
                pl.BlockSpec((n, H, H), lambda i: (0, 0, 0)),   # W2 (all critics)
                pl.BlockSpec((n, 1, H), lambda i: (0, 0, 0)),   # b2
                pl.BlockSpec((n, 1, H), lambda i: (0, 0, 0)),   # w3 head vectors
                pl.BlockSpec((n, 1, 1), lambda i: (0, 0, 0)),   # b3
            ],
            out_specs=pl.BlockSpec((bt, n), lambda i: (i, 0)),
        ),
        compiler_params=pltpu.CompilerParams(
            # batch tiles are independent -> shard across TCs on v7x megacore
            dimension_semantics=("parallel",),
        ),
    )(obs_c, act_c, w1s, w1a, b1f, w2c, b2c, w3v, b3c)

    return q_all


def critic_forward(obs, actions, params, *, compute_dtype=jnp.float32,
                   batch_block=256):
    """Forward pass of the SAC Critic. Returns a tuple (q1, ..., qn), each [B, 1]."""
    q_all = _critic_q_values(obs, actions, params, compute_dtype=compute_dtype,
                             batch_block=batch_block)
    n = q_all.shape[1]
    # Module contract is a tuple of [B, 1] tensors; callers that want the
    # packed [B, n] result can use _critic_q_values directly (no slices).
    return tuple(q_all[:, c:c + 1] for c in range(n))


def init_critic_params(key, state_dim, action_dim, n_critics=2):
    """Deterministic init mimicking PyTorch nn.Linear default
    (U(-1/sqrt(fan_in), 1/sqrt(fan_in))). Weights stored as [in, out]
    (already transposed vs. PyTorch's [out, in])."""
    in_dim = state_dim + action_dim
    dims = [(in_dim, HIDDEN), (HIDDEN, HIDDEN), (HIDDEN, 1)]
    ws, bs = [[], [], []], [[], [], []]
    for _c in range(n_critics):
        for li, (fi, fo) in enumerate(dims):
            key, kw, kb = jax.random.split(key, 3)
            bound = 1.0 / math.sqrt(fi)
            ws[li].append(jax.random.uniform(kw, (fi, fo), jnp.float32, -bound, bound))
            bs[li].append(jax.random.uniform(kb, (1, fo), jnp.float32, -bound, bound))
    w1 = jnp.stack(ws[0]); b1 = jnp.stack(bs[0])
    w2 = jnp.stack(ws[1]); b2 = jnp.stack(bs[1])
    w3 = jnp.stack(ws[2]); b3 = jnp.stack(bs[2])
    return (w1, b1, w2, b2, w3, b3)


def _reference_forward(obs, actions, params):
    """Pure-JAX reference for correctness checking."""
    if obs.ndim == 3:
        obs = obs.reshape(obs.shape[0], -1)
    x = jnp.concatenate((obs, actions), axis=1).astype(jnp.float32)
    w1, b1, w2, b2, w3, b3 = params
    outs = []
    for c in range(w1.shape[0]):
        h = jnp.maximum(x @ w1[c] + b1[c], 0.0)
        h = jnp.maximum(h @ w2[c] + b2[c], 0.0)
        outs.append(h @ w3[c] + b3[c])
    return tuple(outs)


if __name__ == "__main__":
    # TODO(synk): activation_fn is generic in the PyTorch module; ReLU is used
    # here (the standard SAC choice). dropout=0 in the spec -> no dropout layer.
    key = jax.random.PRNGKey(0)
    batch, state_dim, action_dim = 8, 16, 4

    k_obs, k_act, k_par = jax.random.split(key, 3)
    obs = jax.random.normal(k_obs, (batch, state_dim), jnp.float32)
    actions = jax.random.normal(k_act, (batch, action_dim), jnp.float32)
    params = init_critic_params(k_par, state_dim, action_dim, n_critics=2)

    r1, r2 = _reference_forward(obs, actions, params)

    # f32 path (exact module semantics).
    q1, q2 = critic_forward(obs, actions, params)
    jax.block_until_ready((q1, q2))
    assert q1.shape == (batch, 1) and q2.shape == (batch, 1)
    assert jnp.allclose(q1, r1, atol=1e-3, rtol=1e-3)
    assert jnp.allclose(q2, r2, atol=1e-3, rtol=1e-3)

    # 3-D obs path (nn.Flatten(1, -1)); same shapes after flatten -> cached compile.
    obs3 = obs.reshape(batch, 4, 4)
    q1f, q2f = critic_forward(obs3, actions, params)
    jax.block_until_ready((q1f, q2f))
    assert jnp.allclose(q1f, q1, atol=1e-6, rtol=1e-6)
    assert jnp.allclose(q2f, q2, atol=1e-6, rtol=1e-6)

    print("KERNEL_OK")
</pallas_src>

<mosaic_0001>
module attributes {stable_mosaic.version = 11 : i64} {
  func.func @_critic_fused_kernel(%arg0: i32, %arg1: memref<8x16xf32, #tpu.memory_space<vmem>>, %arg2: memref<8x4xf32, #tpu.memory_space<vmem>>, %arg3: memref<16x512xf32, #tpu.memory_space<vmem>>, %arg4: memref<4x512xf32, #tpu.memory_space<vmem>>, %arg5: memref<1x512xf32, #tpu.memory_space<vmem>>, %arg6: memref<2x256x256xf32, #tpu.memory_space<vmem>>, %arg7: memref<2x1x256xf32, #tpu.memory_space<vmem>>, %arg8: memref<2x1x256xf32, #tpu.memory_space<vmem>>, %arg9: memref<2x1x1xf32, #tpu.memory_space<vmem>>, %arg10: memref<8x2xf32, #tpu.memory_space<vmem>>) attributes {dimension_semantics = [#tpu.dimension_semantics<parallel>], iteration_bounds = array<i64: 1>, scalar_prefetch = 0 : i64, scratch_operands = 0 : i64, tpu.core_type = #tpu.core_type<tc>, window_params = [{transform_indices = @transform_0, window_bounds = array<i64: 8, 16>}, {transform_indices = @transform_1, window_bounds = array<i64: 8, 4>}, {pipeline_mode = #tpu.pipeline_mode<synchronous>, transform_indices = @transform_2, window_bounds = array<i64: 16, 512>}, {pipeline_mode = #tpu.pipeline_mode<synchronous>, transform_indices = @transform_3, window_bounds = array<i64: 4, 512>}, {pipeline_mode = #tpu.pipeline_mode<synchronous>, transform_indices = @transform_4, window_bounds = array<i64: 1, 512>}, {pipeline_mode = #tpu.pipeline_mode<synchronous>, transform_indices = @transform_5, window_bounds = array<i64: 2, 256, 256>}, {pipeline_mode = #tpu.pipeline_mode<synchronous>, transform_indices = @transform_6, window_bounds = array<i64: 2, 1, 256>}, {pipeline_mode = #tpu.pipeline_mode<synchronous>, transform_indices = @transform_7, window_bounds = array<i64: 2, 1, 256>}, {pipeline_mode = #tpu.pipeline_mode<synchronous>, transform_indices = @transform_8, window_bounds = array<i64: 2, 1, 1>}, {transform_indices = @transform_9, window_bounds = array<i64: 8, 2>}]} {
    %c0 = arith.constant 0 : index
    %c0_0 = arith.constant 0 : index
    %0 = vector.load %arg1[%c0, %c0_0] : memref<8x16xf32, #tpu.memory_space<vmem>>, vector<8x16xf32>
    %c0_1 = arith.constant 0 : index
    %c0_2 = arith.constant 0 : index
    %1 = vector.load %arg3[%c0_1, %c0_2] : memref<16x512xf32, #tpu.memory_space<vmem>>, vector<16x512xf32>
    %cst = arith.constant dense<0.000000e+00> : vector<8x512xf32>
    %2 = tpu.matmul %0, %1, %cst {dimension_numbers = #tpu.dot_dimension_numbers<[1], [0], [0], [1], [0, 0, 1, 1], [], []>} : vector<8x16xf32>, vector<16x512xf32>, vector<8x512xf32> -> vector<8x512xf32>
    %c0_3 = arith.constant 0 : index
    %c0_4 = arith.constant 0 : index
    %3 = vector.load %arg2[%c0_3, %c0_4] : memref<8x4xf32, #tpu.memory_space<vmem>>, vector<8x4xf32>
    %c0_5 = arith.constant 0 : index
    %c0_6 = arith.constant 0 : index
    %4 = vector.load %arg4[%c0_5, %c0_6] : memref<4x512xf32, #tpu.memory_space<vmem>>, vector<4x512xf32>
    %cst_7 = arith.constant dense<0.000000e+00> : vector<8x512xf32>
    %5 = tpu.matmul %3, %4, %cst_7 {dimension_numbers = #tpu.dot_dimension_numbers<[1], [0], [0], [1], [0, 0, 1, 1], [], []>} : vector<8x4xf32>, vector<4x512xf32>, vector<8x512xf32> -> vector<8x512xf32>
    %6 = arith.addf %2, %5 : vector<8x512xf32>
    %c0_8 = arith.constant 0 : index
    %c0_9 = arith.constant 0 : index
    %7 = vector.load %arg5[%c0_8, %c0_9] : memref<1x512xf32, #tpu.memory_space<vmem>>, vector<1x512xf32>
    %8 = vector.broadcast %7 : vector<1x512xf32> to vector<8x512xf32>
    %9 = arith.addf %6, %8 : vector<8x512xf32>
    %cst_10 = arith.constant 0.000000e+00 : f32
    %10 = vector.broadcast %cst_10 : f32 to vector<8x512xf32>
    %11 = arith.maximumf %9, %10 : vector<8x512xf32>
    %12 = tpu.iota {dimensions = array<i32: 1>} : vector<1x2xi32>
    %cst_11 = arith.constant 0.000000e+00 : f32
    %13 = vector.broadcast %cst_11 : f32 to vector<8x2xf32>
    %14 = vector.extract_strided_slice %11 {offsets = [0, 0], sizes = [8, 256], strides = [1, 1]} : vector<8x512xf32> to vector<8x256xf32>
    %c0_12 = arith.constant 0 : index
    %c0_13 = arith.constant 0 : index
    %c0_14 = arith.constant 0 : index
    %15 = vector.load %arg6[%c0_12, %c0_13, %c0_14] : memref<2x256x256xf32, #tpu.memory_space<vmem>>, vector<1x256x256xf32>
    %16 = vector.shape_cast %15 : vector<1x256x256xf32> to vector<256x256xf32>
    %cst_15 = arith.constant dense<0.000000e+00> : vector<8x256xf32>
    %17 = tpu.matmul %14, %16, %cst_15 {dimension_numbers = #tpu.dot_dimension_numbers<[1], [0], [0], [1], [0, 0, 1, 1], [], []>} : vector<8x256xf32>, vector<256x256xf32>, vector<8x256xf32> -> vector<8x256xf32>
    %c0_16 = arith.constant 0 : index
    %c0_17 = arith.constant 0 : index
    %c0_18 = arith.constant 0 : index
    %18 = vector.load %arg7[%c0_16, %c0_17, %c0_18] : memref<2x1x256xf32, #tpu.memory_space<vmem>>, vector<1x1x256xf32>
    %19 = vector.shape_cast %18 : vector<1x1x256xf32> to vector<1x256xf32>
    %20 = vector.broadcast %19 : vector<1x256xf32> to vector<8x256xf32>
    %21 = arith.addf %17, %20 : vector<8x256xf32>
    %cst_19 = arith.constant 0.000000e+00 : f32
    %22 = vector.broadcast %cst_19 : f32 to vector<8x256xf32>
    %23 = arith.maximumf %21, %22 : vector<8x256xf32>
    %c0_20 = arith.constant 0 : index
    %c0_21 = arith.constant 0 : index
    %c0_22 = arith.constant 0 : index
    %24 = vector.load %arg8[%c0_20, %c0_21, %c0_22] : memref<2x1x256xf32, #tpu.memory_space<vmem>>, vector<1x1x256xf32>
    %25 = vector.shape_cast %24 : vector<1x1x256xf32> to vector<1x256xf32>
    %26 = vector.broadcast %25 : vector<1x256xf32> to vector<8x256xf32>
    %27 = arith.mulf %23, %26 : vector<8x256xf32>
    %cst_23 = arith.constant dense<0.000000e+00> : vector<8xf32>
    %28 = vector.multi_reduction <add>, %27, %cst_23 [1] : vector<8x256xf32> to vector<8xf32>
    %29 = vector.shape_cast %28 : vector<8xf32> to vector<8x1xf32>
    %c0_24 = arith.constant 0 : index
    %c0_25 = arith.constant 0 : index
    %c0_26 = arith.constant 0 : index
    %30 = vector.load %arg9[%c0_24, %c0_25, %c0_26] : memref<2x1x1xf32, #tpu.memory_space<vmem>>, vector<1x1x1xf32>
    %31 = vector.shape_cast %30 : vector<1x1x1xf32> to vector<1x1xf32>
    %32 = vector.broadcast %31 : vector<1x1xf32> to vector<8x1xf32>
    %33 = arith.addf %29, %32 : vector<8x1xf32>
    %c0_i32 = arith.constant 0 : i32
    %34 = vector.broadcast %c0_i32 : i32 to vector<1x2xi32>
    %35 = arith.cmpi eq, %12, %34 : vector<1x2xi32>
    %cst_27 = arith.constant 0.000000e+00 : f32
    %36 = vector.shape_cast %35 : vector<1x2xi1> to vector<1x2xi1>
    %37 = vector.broadcast %36 : vector<1x2xi1> to vector<8x2xi1>
    %38 = vector.shape_cast %33 : vector<8x1xf32> to vector<8x1xf32>
    %39 = vector.broadcast %38 : vector<8x1xf32> to vector<8x2xf32>
    %40 = vector.broadcast %cst_27 : f32 to vector<8x2xf32>
    %41 = arith.select %37, %39, %40 : vector<8x2xi1>, vector<8x2xf32>
    %42 = arith.addf %13, %41 : vector<8x2xf32>
    %43 = vector.extract_strided_slice %11 {offsets = [0, 256], sizes = [8, 256], strides = [1, 1]} : vector<8x512xf32> to vector<8x256xf32>
    %c1 = arith.constant 1 : index
    %c0_28 = arith.constant 0 : index
    %c0_29 = arith.constant 0 : index
    %44 = vector.load %arg6[%c1, %c0_28, %c0_29] : memref<2x256x256xf32, #tpu.memory_space<vmem>>, vector<1x256x256xf32>
    %45 = vector.shape_cast %44 : vector<1x256x256xf32> to vector<256x256xf32>
    %cst_30 = arith.constant dense<0.000000e+00> : vector<8x256xf32>
    %46 = tpu.matmul %43, %45, %cst_30 {dimension_numbers = #tpu.dot_dimension_numbers<[1], [0], [0], [1], [0, 0, 1, 1], [], []>} : vector<8x256xf32>, vector<256x256xf32>, vector<8x256xf32> -> vector<8x256xf32>
    %c1_31 = arith.constant 1 : index
    %c0_32 = arith.constant 0 : index
    %c0_33 = arith.constant 0 : index
    %47 = vector.load %arg7[%c1_31, %c0_32, %c0_33] : memref<2x1x256xf32, #tpu.memory_space<vmem>>, vector<1x1x256xf32>
    %48 = vector.shape_cast %47 : vector<1x1x256xf32> to vector<1x256xf32>
    %49 = vector.broadcast %48 : vector<1x256xf32> to vector<8x256xf32>
    %50 = arith.addf %46, %49 : vector<8x256xf32>
    %cst_34 = arith.constant 0.000000e+00 : f32
    %51 = vector.broadcast %cst_34 : f32 to vector<8x256xf32>
    %52 = arith.maximumf %50, %51 : vector<8x256xf32>
    %c1_35 = arith.constant 1 : index
    %c0_36 = arith.constant 0 : index
    %c0_37 = arith.constant 0 : index
    %53 = vector.load %arg8[%c1_35, %c0_36, %c0_37] : memref<2x1x256xf32, #tpu.memory_space<vmem>>, vector<1x1x256xf32>
    %54 = vector.shape_cast %53 : vector<1x1x256xf32> to vector<1x256xf32>
    %55 = vector.broadcast %54 : vector<1x256xf32> to vector<8x256xf32>
    %56 = arith.mulf %52, %55 : vector<8x256xf32>
    %cst_38 = arith.constant dense<0.000000e+00> : vector<8xf32>
    %57 = vector.multi_reduction <add>, %56, %cst_38 [1] : vector<8x256xf32> to vector<8xf32>
    %58 = vector.shape_cast %57 : vector<8xf32> to vector<8x1xf32>
    %c1_39 = arith.constant 1 : index
    %c0_40 = arith.constant 0 : index
    %c0_41 = arith.constant 0 : index
    %59 = vector.load %arg9[%c1_39, %c0_40, %c0_41] : memref<2x1x1xf32, #tpu.memory_space<vmem>>, vector<1x1x1xf32>
    %60 = vector.shape_cast %59 : vector<1x1x1xf32> to vector<1x1xf32>
    %61 = vector.broadcast %60 : vector<1x1xf32> to vector<8x1xf32>
    %62 = arith.addf %58, %61 : vector<8x1xf32>
    %c1_i32 = arith.constant 1 : i32
    %63 = vector.broadcast %c1_i32 : i32 to vector<1x2xi32>
    %64 = arith.cmpi eq, %12, %63 : vector<1x2xi32>
    %cst_42 = arith.constant 0.000000e+00 : f32
    %65 = vector.shape_cast %64 : vector<1x2xi1> to vector<1x2xi1>
    %66 = vector.broadcast %65 : vector<1x2xi1> to vector<8x2xi1>
    %67 = vector.shape_cast %62 : vector<8x1xf32> to vector<8x1xf32>
    %68 = vector.broadcast %67 : vector<8x1xf32> to vector<8x2xf32>
    %69 = vector.broadcast %cst_42 : f32 to vector<8x2xf32>
    %70 = arith.select %66, %68, %69 : vector<8x2xi1>, vector<8x2xf32>
    %71 = arith.addf %42, %70 : vector<8x2xf32>
    %c0_43 = arith.constant 0 : index
    %c0_44 = arith.constant 0 : index
    %72 = vector.load %arg10[%c0_43, %c0_44] : memref<8x2xf32, #tpu.memory_space<vmem>>, vector<8x2xf32>
    tpu.vector_store %arg10[%c0_43, %c0_44], %71 {strides = array<i32>} : memref<8x2xf32, #tpu.memory_space<vmem>>, vector<8x2xf32>,
    return
  }
  func.func @transform_0(%arg0: i32) -> (i32, i32) {
    %c0_i32 = arith.constant 0 : i32
    %c0_i32_0 = arith.constant 0 : i32
    return %arg0, %c0_i32 : i32, i32
  }
  func.func @transform_1(%arg0: i32) -> (i32, i32) {
    %c0_i32 = arith.constant 0 : i32
    %c0_i32_0 = arith.constant 0 : i32
    return %arg0, %c0_i32 : i32, i32
  }
  func.func @transform_2(%arg0: i32) -> (i32, i32) {
    %c0_i32 = arith.constant 0 : i32
    %c0_i32_0 = arith.constant 0 : i32
    %c0_i32_1 = arith.constant 0 : i32
    return %c0_i32, %c0_i32_0 : i32, i32
  }
  func.func @transform_3(%arg0: i32) -> (i32, i32) {
    %c0_i32 = arith.constant 0 : i32
    %c0_i32_0 = arith.constant 0 : i32
    %c0_i32_1 = arith.constant 0 : i32
    return %c0_i32, %c0_i32_0 : i32, i32
  }
  func.func @transform_4(%arg0: i32) -> (i32, i32) {
    %c0_i32 = arith.constant 0 : i32
    %c0_i32_0 = arith.constant 0 : i32
    %c0_i32_1 = arith.constant 0 : i32
    return %c0_i32, %c0_i32_0 : i32, i32
  }
  func.func @transform_5(%arg0: i32) -> (i32, i32, i32) {
    %c0_i32 = arith.constant 0 : i32
    %c0_i32_0 = arith.constant 0 : i32
    %c0_i32_1 = arith.constant 0 : i32
    %c0_i32_2 = arith.constant 0 : i32
    return %c0_i32, %c0_i32_0, %c0_i32_1 : i32, i32, i32
  }
  func.func @transform_6(%arg0: i32) -> (i32, i32, i32) {
    %c0_i32 = arith.constant 0 : i32
    %c0_i32_0 = arith.constant 0 : i32
    %c0_i32_1 = arith.constant 0 : i32
    %c0_i32_2 = arith.constant 0 : i32
    return %c0_i32, %c0_i32_0, %c0_i32_1 : i32, i32, i32
  }
  func.func @transform_7(%arg0: i32) -> (i32, i32, i32) {
    %c0_i32 = arith.constant 0 : i32
    %c0_i32_0 = arith.constant 0 : i32
    %c0_i32_1 = arith.constant 0 : i32
    %c0_i32_2 = arith.constant 0 : i32
    return %c0_i32, %c0_i32_0, %c0_i32_1 : i32, i32, i32
  }
  func.func @transform_8(%arg0: i32) -> (i32, i32, i32) {
    %c0_i32 = arith.constant 0 : i32
    %c0_i32_0 = arith.constant 0 : i32
    %c0_i32_1 = arith.constant 0 : i32
    %c0_i32_2 = arith.constant 0 : i32
    return %c0_i32, %c0_i32_0, %c0_i32_1 : i32, i32, i32
  }
  func.func @transform_9(%arg0: i32) -> (i32, i32) {
    %c0_i32 = arith.constant 0 : i32
    %c0_i32_0 = arith.constant 0 : i32
    return %arg0, %c0_i32 : i32, i32
  }
}

</mosaic_0001>

<llo_original>
// kernel: tpu_custom_call.1
$region0: #{tpu_custom_call.1}
  #allocation0 [shape = 'u32[]', space=smem, size = 0x4, offset = 0x4, fixed_abs, tag = 'smem constant byte address 0x4 - core index']
  #allocation1 [shape = 'u32[72,128]{1,0:T(1,128)}', space=vmem, size = 0x9000, scoped, tag = 'internal scratch']
  %s0 = inlined_call_operand.vmem [shape: f32[8,16], index: 0, kind: input, shape index: {}]
  %s1 = inlined_call_operand.vmem [shape: f32[8,4], index: 1, kind: input, shape index: {}]
  %s2 = inlined_call_operand.hbm [shape: f32[16,512], index: 2, kind: input, shape index: {}]
  %s3 = inlined_call_operand.hbm [shape: f32[4,512], index: 3, kind: input, shape index: {}]
  %s4 = inlined_call_operand.vmem [shape: f32[1,512], index: 4, kind: input, shape index: {}]
  %s5 = inlined_call_operand.hbm [shape: f32[2,256,256], index: 5, kind: input, shape index: {}]
  %s6 = inlined_call_operand.vmem [shape: f32[2,1,256], index: 6, kind: input, shape index: {}]
  %s7 = inlined_call_operand.hbm [shape: f32[2,1,256], index: 7, kind: input, shape index: {}]
  %s8 = inlined_call_operand.vmem [shape: f32[2,1,1], index: 8, kind: input, shape index: {}]
  %s9 = inlined_call_operand.vmem [shape: f32[8,2], index: 9, kind: output, shape index: {}]
  %s10 = sld [smem:[#allocation0]]
  $region62: #{tpu_custom_call.1} parent=0
    _
  %s12 = ssub.s32 1, %s10
  %s13 = scalar_select 0, %s12, %s10
  $region1: #{tpu_custom_call.1} parent=0
    #allocation2 [shape = 'u8[32768]{0}', space=vmem, size = 0x8000, scoped, tag = 'input window, operand 2, single buffered']
    #allocation3 [shape = 's32[1]{0}', space=sflag, size = 0x4, scoped, tag = 'scoped memory for tpu_custom_call.1']
    #allocation4 [shape = 'u8[8192]{0}', space=vmem, size = 0x2000, scoped, tag = 'input window, operand 3, single buffered']
    #allocation5 [shape = 's32[1]{0}', space=sflag, size = 0x4, scoped, tag = 'scoped memory for tpu_custom_call.1']
    #allocation6 [shape = 'u8[524288]{0}', space=vmem, size = 0x80000, scoped, tag = 'input window, operand 5, single buffered']
    #allocation7 [shape = 'u8[2048]{0}', space=vmem, size = 0x800, scoped, tag = 'input window, operand 7, single buffered']
    #allocation8 [shape = 's32[1]{0}', space=sflag, size = 0x4, scoped, tag = 'scoped memory for tpu_custom_call.1']
    %14 = vsyncpa [#allocation3], 0
    %15 = vsyncpa [#allocation5], 0
    %16 = vsyncpa [#allocation8], 0
    // Predicated region
    $region2: #{tpu_custom_call.1} parent=1 // pred_check
      _
    $region3: #{tpu_custom_call.1} parent=1 // pred_check_branch
      %18 = sbr.rel (0) target = $region5
    $region4: #{tpu_custom_call.1} parent=1 // pred_region
      _
    $region5: #{tpu_custom_call.1} parent=1 // pred_fallthru
      _
    // Predicated region
    $region6: #{tpu_custom_call.1} parent=1 // pred_check
      _
    $region7: #{tpu_custom_call.1} parent=1 // pred_check_branch
      %20 = sbr.rel (0) target = $region9
    $region8: #{tpu_custom_call.1} parent=1 // pred_region
      _
    $region9: #{tpu_custom_call.1} parent=1 // pred_fallthru
      _
    // Predicated region
    $region10: #{tpu_custom_call.1} parent=1 // pred_check
      _
    $region11: #{tpu_custom_call.1} parent=1 // pred_check_branch
      %22 = sbr.rel (0) target = $region13
    $region12: #{tpu_custom_call.1} parent=1 // pred_region
      %24 = vsyncadd [#allocation3], 0
      %s25 = sshll.u32 %s2, 4
      %s26 = int_to_ptr.hbm [resolvable:$true] %s25
      %s27 = sshll.u32 [#allocation2], 4
      %s28 = int_to_ptr.vmem [resolvable:$true] %s27
      %33 = dma.hbm_to_vmem [thread:$0]  %s26, 1024, %s28, [#allocation3], 512, 512, 32
    $region13: #{tpu_custom_call.1} parent=1 // pred_fallthru
      _
    // Predicated region
    $region14: #{tpu_custom_call.1} parent=1 // pred_check
      _
    $region15: #{tpu_custom_call.1} parent=1 // pred_check_branch
      %35 = sbr.rel (0) target = $region17
    $region16: #{tpu_custom_call.1} parent=1 // pred_region
      %37 = vsyncadd [#allocation5], 0
      %s39 = sshll.u32 %s3, 4
      %s40 = int_to_ptr.hbm [resolvable:$true] %s39
      %s41 = sshll.u32 [#allocation4], 4
      %s42 = int_to_ptr.vmem [resolvable:$true] %s41
      %44 = dma.hbm_to_vmem [thread:$0]  %s40, 256, %s42, [#allocation5]
    $region17: #{tpu_custom_call.1} parent=1 // pred_fallthru
      _
    // Predicated region
    $region18: #{tpu_custom_call.1} parent=1 // pred_check
      _
    $region19: #{tpu_custom_call.1} parent=1 // pred_check_branch
      %46 = sbr.rel (0) target = $region21
    $region20: #{tpu_custom_call.1} parent=1 // pred_region
      _
    $region21: #{tpu_custom_call.1} parent=1 // pred_fallthru
      _
    // Predicated region
    $region22: #{tpu_custom_call.1} parent=1 // pred_check
      _
    $region23: #{tpu_custom_call.1} parent=1 // pred_check_branch
      %48 = sbr.rel (0) target = $region25
    $region24: #{tpu_custom_call.1} parent=1 // pred_region
      %50 = vsyncadd [#allocation5], 0
      %s51 = sshll.u32 %s5, 4
      %s52 = int_to_ptr.hbm [resolvable:$true] %s51
      %s53 = sshll.u32 [#allocation6], 4
      %s54 = int_to_ptr.vmem [resolvable:$true] %s53
      %59 = dma.hbm_to_vmem [thread:$0]  %s52, 16384, %s54, [#allocation5], 256, 256, 16
    $region25: #{tpu_custom_call.1} parent=1 // pred_fallthru
      _
    // Predicated region
    $region26: #{tpu_custom_call.1} parent=1 // pred_check
      _
    $region27: #{tpu_custom_call.1} parent=1 // pred_check_branch
      %61 = sbr.rel (0) target = $region29
    $region28: #{tpu_custom_call.1} parent=1 // pred_region
      _
    $region29: #{tpu_custom_call.1} parent=1 // pred_fallthru
      _
    // Predicated region
    $region30: #{tpu_custom_call.1} parent=1 // pred_check
      _
    $region31: #{tpu_custom_call.1} parent=1 // pred_check_branch
      %63 = sbr.rel (0) target = $region33
    $region32: #{tpu_custom_call.1} parent=1 // pred_region
      %65 = vsyncadd [#allocation8], 0
      %s66 = sshll.u32 %s7, 4
      %s67 = int_to_ptr.hbm [resolvable:$true] %s66
      %s68 = sshll.u32 [#allocation7], 4
      %s69 = int_to_ptr.vmem [resolvable:$true] %s68
      %74 = dma.hbm_to_vmem [thread:$0]  %s67, 64, %s69, [#allocation8], 32, 32, 2
    $region33: #{tpu_custom_call.1} parent=1 // pred_fallthru
      _
    // Predicated region
    $region34: #{tpu_custom_call.1} parent=1 // pred_check
      _
    $region35: #{tpu_custom_call.1} parent=1 // pred_check_branch
      %76 = sbr.rel (0) target = $region37
    $region36: #{tpu_custom_call.1} parent=1 // pred_region
      _
    $region37: #{tpu_custom_call.1} parent=1 // pred_fallthru
      _
    // Predicated region
    $region38: #{tpu_custom_call.1} parent=1 // pred_check
      _
    $region39: #{tpu_custom_call.1} parent=1 // pred_check_branch
      %78 = sbr.rel (0) target = $region41
    $region40: #{tpu_custom_call.1} parent=1 // pred_region
      %80 = dma.done [#allocation3], 1024
    $region41: #{tpu_custom_call.1} parent=1 // pred_fallthru
      _
    // Predicated region
    $region42: #{tpu_custom_call.1} parent=1 // pred_check
      _
    $region43: #{tpu_custom_call.1} parent=1 // pred_check_branch
      %82 = sbr.rel (0) target = $region45
    $region44: #{tpu_custom_call.1} parent=1 // pred_region
      %84 = dma.done [#allocation5], 256
    $region45: #{tpu_custom_call.1} parent=1 // pred_fallthru
      _
    // Predicated region
    $region46: #{tpu_custom_call.1} parent=1 // pred_check
      _
    $region47: #{tpu_custom_call.1} parent=1 // pred_check_branch
      %86 = sbr.rel (0) target = $region49
    $region48: #{tpu_custom_call.1} parent=1 // pred_region
      %88 = dma.done [#allocation5], 16384
    $region49: #{tpu_custom_call.1} parent=1 // pred_fallthru
      _
    // Predicated region
    $region50: #{tpu_custom_call.1} parent=1 // pred_check
      _
    $region51: #{tpu_custom_call.1} parent=1 // pred_check_branch
      %90 = sbr.rel (0) target = $region53
    $region52: #{tpu_custom_call.1} parent=1 // pred_region
      %92 = dma.done [#allocation8], 64
    $region53: #{tpu_custom_call.1} parent=1 // pred_fallthru
      _
    %v93 = vld [vmem:[%s0] sm:$0xff]
    %v94 = vld [vmem:[#allocation2] sm:$0xff]
    %v95 = vld [vmem:[#allocation2 + $0x8] sm:$0xff]
    %v96 = vld [vmem:[#allocation2 + $0x10] sm:$0xff]
    %v97 = vld [vmem:[#allocation2 + $0x18] sm:$0xff]
    %v98 = vld [vmem:[#allocation2 + $0x20] sm:$0xff]
    %v99 = vld [vmem:[#allocation2 + $0x28] sm:$0xff]
    %v100 = vld [vmem:[#allocation2 + $0x30] sm:$0xff]
    %v101 = vld [vmem:[#allocation2 + $0x38] sm:$0xff]
    %v102 = vld [vmem:[%s1] sm:$0xff]
    %v103 = vld [vmem:[#allocation4] sm:$0xff]
    %v104 = vld [vmem:[#allocation4 + $0x8] sm:$0xff]
    %107 = vst [vmem:[#allocation1] ss:$2 sm:$0xff] %v103
    %s108 = scalar_lea.vmem [#allocation1], 16
    %109 = vst [vmem:[%s108] ss:$2 sm:$0xff] %v104
    %v110 = vld.sshfl [vmem:[#allocation1] sm:$0xff pattern:$0x75316420]
    %v111 = vld.sshfl [vmem:[#allocation1 + $0x8] sm:$0xff pattern:$0x75316420]
    %v112 = vld.sshfl [vmem:[#allocation1 + $0x10] sm:$0xff pattern:$0x75316420]
    %v113 = vld.sshfl [vmem:[#allocation1 + $0x18] sm:$0xff pattern:$0x75316420]
    %vm114 = vcmask 31744
    %v116 = vsel %vm114, %v102, 0
    %vm118 = vcmask 1043456
    %v119 = vsel %vm118, %v110, 0
    %v121 = vsel %vm118, %v111, 0
    %v123 = vsel %vm118, %v112, 0
    %v125 = vsel %vm118, %v113, 0
    %127 = vmatpush.msra.mxu0 0.0
    %128 = vmatpush.msra.mxu0 0.0
    %129 = vmatpush.msra.mxu0 0.0
    %130 = vmatpush.msra.mxu0 0.0
    %131 = vmatpush.msra.mxu0 0.0
    %132 = vmatpush.msra.mxu0 0.0
    %133 = vmatpush.msra.mxu0 0.0
    %134 = vmatpush.msra.mxu0 0.0
    %135 = vmatpush.msra.mxu0 0.0
    %136 = vmatpush.msra.mxu0 0.0
    %137 = vmatpush.msra.mxu0 0.0
    %138 = vmatpush.msra.mxu0 0.0
    %139 = vmatpush.msra.mxu0 0.0
    %140 = vmatpush.msra.mxu0 0.0
    %141 = vmatpush.msra.mxu0 0.0
    %142 = vmatpush.msra.mxu0 %v119
    %143 = vmatmul.f32.gmra.mxu0 %v116
    %v144 = vpop.f32.mrf.mxu0
    %v145 = vadd.f32 0.0, %v144
    %146 = vdwg.mxu0
    %147 = vmatpush.msra.mxu0 0.0
    %148 = vmatpush.msra.mxu0 0.0
    %149 = vmatpush.msra.mxu0 0.0
    %150 = vmatpush.msra.mxu0 0.0
    %151 = vmatpush.msra.mxu0 0.0
    %152 = vmatpush.msra.mxu0 0.0
    %153 = vmatpush.msra.mxu0 0.0
    %154 = vmatpush.msra.mxu0 0.0
    %155 = vmatpush.msra.mxu0 0.0
    %156 = vmatpush.msra.mxu0 0.0
    %157 = vmatpush.msra.mxu0 0.0
    %158 = vmatpush.msra.mxu0 0.0
    %159 = vmatpush.msra.mxu0 0.0
    %160 = vmatpush.msra.mxu0 0.0
    %161 = vmatpush.msra.mxu0 0.0
    %162 = vmatpush.msra.mxu0 %v121
    %163 = vmatmul.f32.gmra.mxu0 %v116
    %v164 = vpop.f32.mrf.mxu0
    %v165 = vadd.f32 0.0, %v164
    %166 = vdwg.mxu0
    %167 = vmatpush.msra.mxu0 0.0
    %168 = vmatpush.msra.mxu0 0.0
    %169 = vmatpush.msra.mxu0 0.0
    %170 = vmatpush.msra.mxu0 0.0
    %171 = vmatpush.msra.mxu0 0.0
    %172 = vmatpush.msra.mxu0 0.0
    %173 = vmatpush.msra.mxu0 0.0
    %174 = vmatpush.msra.mxu0 0.0
    %175 = vmatpush.msra.mxu0 0.0
    %176 = vmatpush.msra.mxu0 0.0
    %177 = vmatpush.msra.mxu0 0.0
    %178 = vmatpush.msra.mxu0 0.0
    %179 = vmatpush.msra.mxu0 0.0
    %180 = vmatpush.msra.mxu0 0.0
    %181 = vmatpush.msra.mxu0 0.0
    %182 = vmatpush.msra.mxu0 %v123
    %183 = vmatmul.f32.gmra.mxu0 %v116
    %v184 = vpop.f32.mrf.mxu0
    %v185 = vadd.f32 0.0, %v184
    %186 = vdwg.mxu0
    %187 = vmatpush.msra.mxu0 0.0
    %188 = vmatpush.msra.mxu0 0.0
    %189 = vmatpush.msra.mxu0 0.0
    %190 = vmatpush.msra.mxu0 0.0
    %191 = vmatpush.msra.mxu0 0.0
    %192 = vmatpush.msra.mxu0 0.0
    %193 = vmatpush.msra.mxu0 0.0
    %194 = vmatpush.msra.mxu0 0.0
    %195 = vmatpush.msra.mxu0 0.0
    %196 = vmatpush.msra.mxu0 0.0
    %197 = vmatpush.msra.mxu0 0.0
    %198 = vmatpush.msra.mxu0 0.0
    %199 = vmatpush.msra.mxu0 0.0
    %200 = vmatpush.msra.mxu0 0.0
    %201 = vmatpush.msra.mxu0 0.0
    %202 = vmatpush.msra.mxu0 %v125
    %203 = vmatmul.f32.gmra.mxu0 %v116
    %v204 = vpop.f32.mrf.mxu0
    %v205 = vadd.f32 0.0, %v204
    %206 = vdwg.mxu0
    %vm207 = vcmask 130048
    %v209 = vsel %vm207, %v93, 0
    %211 = vmatpush.msra.mxu0 0.0
    %212 = vmatpush.msra.mxu0 0.0
    %213 = vmatpush.msra.mxu0 0.0
    %214 = vmatpush.msra.mxu0 0.0
    %215 = vmatpush.msra.mxu0 0.0
    %216 = vmatpush.msra.mxu0 0.0
    %217 = vmatpush.msra.mxu0 0.0
    %218 = vmatpush.msra.mxu0 0.0
    %219 = vmatpush.msra.mxu0 0.0
    %220 = vmatpush.msra.mxu0 0.0
    %221 = vmatpush.msra.mxu0 0.0
    %222 = vmatpush.msra.mxu0 0.0
    %223 = vmatpush.msra.mxu0 0.0
    %224 = vmatpush.msra.mxu0 0.0
    %225 = vmatpush.msra.mxu0 %v98
    %226 = vmatpush.msra.mxu0 %v94
    %227 = vmatmul.f32.gmra.mxu0 %v209
    %v228 = vpop.f32.mrf.mxu0
    %v229 = vadd.f32 %v145, %v228
    %230 = vdwg.mxu0
    %231 = vmatpush.msra.mxu0 0.0
    %232 = vmatpush.msra.mxu0 0.0
    %233 = vmatpush.msra.mxu0 0.0
    %234 = vmatpush.msra.mxu0 0.0
    %235 = vmatpush.msra.mxu0 0.0
    %236 = vmatpush.msra.mxu0 0.0
    %237 = vmatpush.msra.mxu0 0.0
    %238 = vmatpush.msra.mxu0 0.0
    %239 = vmatpush.msra.mxu0 0.0
    %240 = vmatpush.msra.mxu0 0.0
    %241 = vmatpush.msra.mxu0 0.0
    %242 = vmatpush.msra.mxu0 0.0
    %243 = vmatpush.msra.mxu0 0.0
    %244 = vmatpush.msra.mxu0 0.0
    %245 = vmatpush.msra.mxu0 %v99
    %246 = vmatpush.msra.mxu0 %v95
    %247 = vmatmul.f32.gmra.mxu0 %v209
    %v248 = vpop.f32.mrf.mxu0
    %v249 = vadd.f32 %v165, %v248
    %250 = vdwg.mxu0
    %251 = vmatpush.msra.mxu0 0.0
    %252 = vmatpush.msra.mxu0 0.0
    %253 = vmatpush.msra.mxu0 0.0
    %254 = vmatpush.msra.mxu0 0.0
    %255 = vmatpush.msra.mxu0 0.0
    %256 = vmatpush.msra.mxu0 0.0
    %257 = vmatpush.msra.mxu0 0.0
    %258 = vmatpush.msra.mxu0 0.0
    %259 = vmatpush.msra.mxu0 0.0
    %260 = vmatpush.msra.mxu0 0.0
    %261 = vmatpush.msra.mxu0 0.0
    %262 = vmatpush.msra.mxu0 0.0
    %263 = vmatpush.msra.mxu0 0.0
    %264 = vmatpush.msra.mxu0 0.0
    %265 = vmatpush.msra.mxu0 %v100
    %266 = vmatpush.msra.mxu0 %v96
    %267 = vmatmul.f32.gmra.mxu0 %v209
    %v268 = vpop.f32.mrf.mxu0
    %v269 = vadd.f32 %v185, %v268
    %270 = vdwg.mxu0
    %271 = vmatpush.msra.mxu0 0.0
    %272 = vmatpush.msra.mxu0 0.0
    %273 = vmatpush.msra.mxu0 0.0
    %274 = vmatpush.msra.mxu0 0.0
    %275 = vmatpush.msra.mxu0 0.0
    %276 = vmatpush.msra.mxu0 0.0
    %277 = vmatpush.msra.mxu0 0.0
    %278 = vmatpush.msra.mxu0 0.0
    %279 = vmatpush.msra.mxu0 0.0
    %280 = vmatpush.msra.mxu0 0.0
    %281 = vmatpush.msra.mxu0 0.0
    %282 = vmatpush.msra.mxu0 0.0
    %283 = vmatpush.msra.mxu0 0.0
    %284 = vmatpush.msra.mxu0 0.0
    %285 = vmatpush.msra.mxu0 %v101
    %286 = vmatpush.msra.mxu0 %v97
    %287 = vmatmul.f32.gmra.mxu0 %v209
    %v288 = vpop.f32.mrf.mxu0
    %v289 = vadd.f32 %v205, %v288
    %290 = vdwg.mxu0
    %v291 = vld [vmem:[%s4] sm:$0xf]
    %v293 = vperm.slane %v291, 0
    %v294 = vperm.slane %v291, 1
    %v295 = vperm.slane %v291, 2
    %v296 = vperm.slane %v291, 3
    %v301 = vadd.f32 %v229, %v293
    %v302 = vadd.f32 %v249, %v294
    %v303 = vadd.f32 %v269, %v295
    %v304 = vadd.f32 %v289, %v296
    %v305 = vmax.f32 %v301, 0.0
    %v306 = vmax.f32 %v302, 0.0
    %v307 = vmax.f32 %v303, 0.0
    %v308 = vmax.f32 %v304, 0.0
    %v309 = vlaneseq
    %v310 = vand.u32 %v309, 127
    %v311 = vld [vmem:[#allocation6] sm:$0xff]
    %v312 = vld [vmem:[#allocation6 + $0x8] sm:$0xff]
    %v313 = vld [vmem:[#allocation6 + $0x10] sm:$0xff]
    %v314 = vld [vmem:[#allocation6 + $0x18] sm:$0xff]
    %v315 = vld [vmem:[#allocation6 + $0x20] sm:$0xff]
    %v316 = vld [vmem:[#allocation6 + $0x28] sm:$0xff]
    %v317 = vld [vmem:[#allocation6 + $0x30] sm:$0xff]
    %v318 = vld [vmem:[#allocation6 + $0x38] sm:$0xff]
    %v319 = vld [vmem:[#allocation6 + $0x40] sm:$0xff]
    %v320 = vld [vmem:[#allocation6 + $0x48] sm:$0xff]
    %v321 = vld [vmem:[#allocation6 + $0x50] sm:$0xff]
    %v322 = vld [vmem:[#allocation6 + $0x58] sm:$0xff]
    %v323 = vld [vmem:[#allocation6 + $0x60] sm:$0xff]
    %v324 = vld [vmem:[#allocation6 + $0x68] sm:$0xff]
    %v325 = vld [vmem:[#allocation6 + $0x70] sm:$0xff]
    %v326 = vld [vmem:[#allocation6 + $0x78] sm:$0xff]
    %v327 = vld [vmem:[#allocation6 + $0x80] sm:$0xff]
    %v328 = vld [vmem:[#allocation6 + $0x88] sm:$0xff]
    %v329 = vld [vmem:[#allocation6 + $0x90] sm:$0xff]
    %v330 = vld [vmem:[#allocation6 + $0x98] sm:$0xff]
    %v331 = vld [vmem:[#allocation6 + $0xa0] sm:$0xff]
    %v332 = vld [vmem:[#allocation6 + $0xa8] sm:$0xff]
    %v333 = vld [vmem:[#allocation6 + $0xb0] sm:$0xff]
    %v334 = vld [vmem:[#allocation6 + $0xb8] sm:$0xff]
    %v335 = vld [vmem:[#allocation6 + $0xc0] sm:$0xff]
    %v336 = vld [vmem:[#allocation6 + $0xc8] sm:$0xff]
    %v337 = vld [vmem:[#allocation6 + $0xd0] sm:$0xff]
    %v338 = vld [vmem:[#allocation6 + $0xd8] sm:$0xff]
    %v339 = vld [vmem:[#allocation6 + $0xe0] sm:$0xff]
    %v340 = vld [vmem:[#allocation6 + $0xe8] sm:$0xff]
    %v341 = vld [vmem:[#allocation6 + $0xf0] sm:$0xff]
    %v342 = vld [vmem:[#allocation6 + $0xf8] sm:$0xff]
    %v343 = vld [vmem:[#allocation6 + $0x100] sm:$0xff]
    %v344 = vld [vmem:[#allocation6 + $0x108] sm:$0xff]
    %v345 = vld [vmem:[#allocation6 + $0x110] sm:$0xff]
    %v346 = vld [vmem:[#allocation6 + $0x118] sm:$0xff]
    %v347 = vld [vmem:[#allocation6 + $0x120] sm:$0xff]
    %v348 = vld [vmem:[#allocation6 + $0x128] sm:$0xff]
    %v349 = vld [vmem:[#allocation6 + $0x130] sm:$0xff]
    %v350 = vld [vmem:[#allocation6 + $0x138] sm:$0xff]
    %v351 = vld [vmem:[#allocation6 + $0x140] sm:$0xff]
    %v352 = vld [vmem:[#allocation6 + $0x148] sm:$0xff]
    %v353 = vld [vmem:[#allocation6 + $0x150] sm:$0xff]
    %v354 = vld [vmem:[#allocation6 + $0x158] sm:$0xff]
    %v355 = vld [vmem:[#allocation6 + $0x160] sm:$0xff]
    %v356 = vld [vmem:[#allocation6 + $0x168] sm:$0xff]
    %v357 = vld [vmem:[#allocation6 + $0x170] sm:$0xff]
    %v358 = vld [vmem:[#allocation6 + $0x178] sm:$0xff]
    %v359 = vld [vmem:[#allocation6 + $0x180] sm:$0xff]
    %v360 = vld [vmem:[#allocation6 + $0x188] sm:$0xff]
    %v361 = vld [vmem:[#allocation6 + $0x190] sm:$0xff]
    %v362 = vld [vmem:[#allocation6 + $0x198] sm:$0xff]
    %v363 = vld [vmem:[#allocation6 + $0x1a0] sm:$0xff]
    %v364 = vld [vmem:[#allocation6 + $0x1a8] sm:$0xff]
    %v365 = vld [vmem:[#allocation6 + $0x1b0] sm:$0xff]
    %v366 = vld [vmem:[#allocation6 + $0x1b8] sm:$0xff]
    %v367 = vld [vmem:[#allocation6 + $0x1c0] sm:$0xff]
    %v368 = vld [vmem:[#allocation6 + $0x1c8] sm:$0xff]
    %v369 = vld [vmem:[#allocation6 + $0x1d0] sm:$0xff]
    %v370 = vld [vmem:[#allocation6 + $0x1d8] sm:$0xff]
    %v371 = vld [vmem:[#allocation6 + $0x1e0] sm:$0xff]
    %v372 = vld [vmem:[#allocation6 + $0x1e8] sm:$0xff]
    %v373 = vld [vmem:[#allocation6 + $0x1f0] sm:$0xff]
    %v374 = vld [vmem:[#allocation6 + $0x1f8] sm:$0xff]
    %v375 = vld [vmem:[%s6] sm:$0x3]
    %v377 = vperm.slane %v375, 0
    %v378 = vperm.slane %v375, 1
    %381 = vmatpush.msra.mxu0 %v341
    %382 = vmatpush.msra.mxu0 %v339
    %383 = vmatpush.msra.mxu0 %v337
    %384 = vmatpush.msra.mxu0 %v335
    %385 = vmatpush.msra.mxu0 %v333
    %386 = vmatpush.msra.mxu0 %v331
    %387 = vmatpush.msra.mxu0 %v329
    %388 = vmatpush.msra.mxu0 %v327
    %389 = vmatpush.msra.mxu0 %v325
    %390 = vmatpush.msra.mxu0 %v323
    %391 = vmatpush.msra.mxu0 %v321
    %392 = vmatpush.msra.mxu0 %v319
    %393 = vmatpush.msra.mxu0 %v317
    %394 = vmatpush.msra.mxu0 %v315
    %395 = vmatpush.msra.mxu0 %v313
    %396 = vmatpush.msra.mxu0 %v311
    %397 = vmatmul.f32.gmra.mxu0 %v305
    %v398 = vpop.f32.mrf.mxu0
    %v399 = vadd.f32 %v377, %v398
    %400 = vdwg.mxu0
    %401 = vmatpush.msra.mxu0 %v373
    %402 = vmatpush.msra.mxu0 %v371
    %403 = vmatpush.msra.mxu0 %v369
    %404 = vmatpush.msra.mxu0 %v367
    %405 = vmatpush.msra.mxu0 %v365
    %406 = vmatpush.msra.mxu0 %v363
    %407 = vmatpush.msra.mxu0 %v361
    %408 = vmatpush.msra.mxu0 %v359
    %409 = vmatpush.msra.mxu0 %v357
    %410 = vmatpush.msra.mxu0 %v355
    %411 = vmatpush.msra.mxu0 %v353
    %412 = vmatpush.msra.mxu0 %v351
    %413 = vmatpush.msra.mxu0 %v349
    %414 = vmatpush.msra.mxu0 %v347
    %415 = vmatpush.msra.mxu0 %v345
    %416 = vmatpush.msra.mxu0 %v343
    %417 = vmatmul.f32.gmra.mxu0 %v306
    %v418 = vpop.f32.mrf.mxu0
    %v419 = vadd.f32 %v399, %v418
    %420 = vdwg.mxu0
    %421 = vmatpush.msra.mxu0 %v342
    %422 = vmatpush.msra.mxu0 %v340
    %423 = vmatpush.msra.mxu0 %v338
    %424 = vmatpush.msra.mxu0 %v336
    %425 = vmatpush.msra.mxu0 %v334
    %426 = vmatpush.msra.mxu0 %v332
    %427 = vmatpush.msra.mxu0 %v330
    %428 = vmatpush.msra.mxu0 %v328
    %429 = vmatpush.msra.mxu0 %v326
    %430 = vmatpush.msra.mxu0 %v324
    %431 = vmatpush.msra.mxu0 %v322
    %432 = vmatpush.msra.mxu0 %v320
    %433 = vmatpush.msra.mxu0 %v318
    %434 = vmatpush.msra.mxu0 %v316
    %435 = vmatpush.msra.mxu0 %v314
    %436 = vmatpush.msra.mxu0 %v312
    %437 = vmatmul.f32.gmra.mxu0 %v305
    %v438 = vpop.f32.mrf.mxu0
    %v439 = vadd.f32 %v378, %v438
    %440 = vdwg.mxu0
    %441 = vmatpush.msra.mxu0 %v374
    %442 = vmatpush.msra.mxu0 %v372
    %443 = vmatpush.msra.mxu0 %v370
    %444 = vmatpush.msra.mxu0 %v368
    %445 = vmatpush.msra.mxu0 %v366
    %446 = vmatpush.msra.mxu0 %v364
    %447 = vmatpush.msra.mxu0 %v362
    %448 = vmatpush.msra.mxu0 %v360
    %449 = vmatpush.msra.mxu0 %v358
    %450 = vmatpush.msra.mxu0 %v356
    %451 = vmatpush.msra.mxu0 %v354
    %452 = vmatpush.msra.mxu0 %v352
    %453 = vmatpush.msra.mxu0 %v350
    %454 = vmatpush.msra.mxu0 %v348
    %455 = vmatpush.msra.mxu0 %v346
    %456 = vmatpush.msra.mxu0 %v344
    %457 = vmatmul.f32.gmra.mxu0 %v306
    %v458 = vpop.f32.mrf.mxu0
    %v459 = vadd.f32 %v439, %v458
    %460 = vdwg.mxu0
    %v461 = vmax.f32 %v419, 0.0
    %v462 = vmax.f32 %v459, 0.0
    %v463 = vld [vmem:[#allocation7] sm:$0x3]
    %v465 = vperm.slane %v463, 0
    %v466 = vperm.slane %v463, 1
    %v469 = vmul.f32 %v461, %v465
    %v470 = vmul.f32 %v462, %v466
    %v471 = vadd.f32 %v469, %v470
    %472 = vadd.xlane.f32.xlu0 %v471
    %v473 = vpop.xlane.xlu0 %472
    %v474 = vld [vmem:[%s8] sm:$0x1]
    %v476 = vperm.slane %v474, 0
    %v478 = vadd.f32 %v473, %v476
    %vm479 = vcmp.eq.s32.totalorder %v310, 0
    %v480 = vsel %vm479, 1, 0
    %vm481 = vcmp.eq.s32.totalorder %v480, 1
    %483 = vset.pattern.permute.xlu0 0
    %484 = vperm.xlu0 %483, %v478
    %v485 = vpop.permute.xlu0 %484
    %v487 = vsel %vm481, %v485, 0.0
    %v488 = vadd.f32 %v487, 0.0
    %s489 = scalar_lea.vmem [#allocation6], 512
    %v490 = vld [vmem:[%s489] sm:$0xff]
    %v491 = vld [vmem:[%s489 + $0x8] sm:$0xff]
    %v492 = vld [vmem:[%s489 + $0x10] sm:$0xff]
    %v493 = vld [vmem:[%s489 + $0x18] sm:$0xff]
    %v494 = vld [vmem:[%s489 + $0x20] sm:$0xff]
    %v495 = vld [vmem:[%s489 + $0x28] sm:$0xff]
    %v496 = vld [vmem:[%s489 + $0x30] sm:$0xff]
    %v497 = vld [vmem:[%s489 + $0x38] sm:$0xff]
    %v498 = vld [vmem:[%s489 + $0x40] sm:$0xff]
    %v499 = vld [vmem:[%s489 + $0x48] sm:$0xff]
    %v500 = vld [vmem:[%s489 + $0x50] sm:$0xff]
    %v501 = vld [vmem:[%s489 + $0x58] sm:$0xff]
    %v502 = vld [vmem:[%s489 + $0x60] sm:$0xff]
    %v503 = vld [vmem:[%s489 + $0x68] sm:$0xff]
    %v504 = vld [vmem:[%s489 + $0x70] sm:$0xff]
    %v505 = vld [vmem:[%s489 + $0x78] sm:$0xff]
    %v506 = vld [vmem:[%s489 + $0x80] sm:$0xff]
    %v507 = vld [vmem:[%s489 + $0x88] sm:$0xff]
    %v508 = vld [vmem:[%s489 + $0x90] sm:$0xff]
    %v509 = vld [vmem:[%s489 + $0x98] sm:$0xff]
    %v510 = vld [vmem:[%s489 + $0xa0] sm:$0xff]
    %v511 = vld [vmem:[%s489 + $0xa8] sm:$0xff]
    %v512 = vld [vmem:[%s489 + $0xb0] sm:$0xff]
    %v513 = vld [vmem:[%s489 + $0xb8] sm:$0xff]
    %v514 = vld [vmem:[%s489 + $0xc0] sm:$0xff]
    %v515 = vld [vmem:[%s489 + $0xc8] sm:$0xff]
    %v516 = vld [vmem:[%s489 + $0xd0] sm:$0xff]
    %v517 = vld [vmem:[%s489 + $0xd8] sm:$0xff]
    %v518 = vld [vmem:[%s489 + $0xe0] sm:$0xff]
    %v519 = vld [vmem:[%s489 + $0xe8] sm:$0xff]
    %v520 = vld [vmem:[%s489 + $0xf0] sm:$0xff]
    %v521 = vld [vmem:[%s489 + $0xf8] sm:$0xff]
    %v522 = vld [vmem:[%s489 + $0x100] sm:$0xff]
    %v523 = vld [vmem:[%s489 + $0x108] sm:$0xff]
    %v524 = vld [vmem:[%s489 + $0x110] sm:$0xff]
    %v525 = vld [vmem:[%s489 + $0x118] sm:$0xff]
    %v526 = vld [vmem:[%s489 + $0x120] sm:$0xff]
    %v527 = vld [vmem:[%s489 + $0x128] sm:$0xff]
    %v528 = vld [vmem:[%s489 + $0x130] sm:$0xff]
    %v529 = vld [vmem:[%s489 + $0x138] sm:$0xff]
    %v530 = vld [vmem:[%s489 + $0x140] sm:$0xff]
    %v531 = vld [vmem:[%s489 + $0x148] sm:$0xff]
    %v532 = vld [vmem:[%s489 + $0x150] sm:$0xff]
    %v533 = vld [vmem:[%s489 + $0x158] sm:$0xff]
    %v534 = vld [vmem:[%s489 + $0x160] sm:$0xff]
    %v535 = vld [vmem:[%s489 + $0x168] sm:$0xff]
    %v536 = vld [vmem:[%s489 + $0x170] sm:$0xff]
    %v537 = vld [vmem:[%s489 + $0x178] sm:$0xff]
    %v538 = vld [vmem:[%s489 + $0x180] sm:$0xff]
    %v539 = vld [vmem:[%s489 + $0x188] sm:$0xff]
    %v540 = vld [vmem:[%s489 + $0x190] sm:$0xff]
    %v541 = vld [vmem:[%s489 + $0x198] sm:$0xff]
    %v542 = vld [vmem:[%s489 + $0x1a0] sm:$0xff]
    %v543 = vld [vmem:[%s489 + $0x1a8] sm:$0xff]
    %v544 = vld [vmem:[%s489 + $0x1b0] sm:$0xff]
    %v545 = vld [vmem:[%s489 + $0x1b8] sm:$0xff]
    %v546 = vld [vmem:[%s489 + $0x1c0] sm:$0xff]
    %v547 = vld [vmem:[%s489 + $0x1c8] sm:$0xff]
    %v548 = vld [vmem:[%s489 + $0x1d0] sm:$0xff]
    %v549 = vld [vmem:[%s489 + $0x1d8] sm:$0xff]
    %v550 = vld [vmem:[%s489 + $0x1e0] sm:$0xff]
    %v551 = vld [vmem:[%s489 + $0x1e8] sm:$0xff]
    %v552 = vld [vmem:[%s489 + $0x1f0] sm:$0xff]
    %v553 = vld [vmem:[%s489 + $0x1f8] sm:$0xff]
    %s554 = scalar_lea.vmem %s6, 2
    %v555 = vld [vmem:[%s554] sm:$0x3]
    %v557 = vperm.slane %v555, 0
    %v558 = vperm.slane %v555, 1
    %561 = vmatpush.msra.mxu0 %v520
    %562 = vmatpush.msra.mxu0 %v518
    %563 = vmatpush.msra.mxu0 %v516
    %564 = vmatpush.msra.mxu0 %v514
    %565 = vmatpush.msra.mxu0 %v512
    %566 = vmatpush.msra.mxu0 %v510
    %567 = vmatpush.msra.mxu0 %v508
    %568 = vmatpush.msra.mxu0 %v506
    %569 = vmatpush.msra.mxu0 %v504
    %570 = vmatpush.msra.mxu0 %v502
    %571 = vmatpush.msra.mxu0 %v500
    %572 = vmatpush.msra.mxu0 %v498
    %573 = vmatpush.msra.mxu0 %v496
    %574 = vmatpush.msra.mxu0 %v494
    %575 = vmatpush.msra.mxu0 %v492
    %576 = vmatpush.msra.mxu0 %v490
    %577 = vmatmul.f32.gmra.mxu0 %v307
    %v578 = vpop.f32.mrf.mxu0
    %v579 = vadd.f32 %v557, %v578
    %580 = vdwg.mxu0
    %581 = vmatpush.msra.mxu0 %v552
    %582 = vmatpush.msra.mxu0 %v550
    %583 = vmatpush.msra.mxu0 %v548
    %584 = vmatpush.msra.mxu0 %v546
    %585 = vmatpush.msra.mxu0 %v544
    %586 = vmatpush.msra.mxu0 %v542
    %587 = vmatpush.msra.mxu0 %v540
    %588 = vmatpush.msra.mxu0 %v538
    %589 = vmatpush.msra.mxu0 %v536
    %590 = vmatpush.msra.mxu0 %v534
    %591 = vmatpush.msra.mxu0 %v532
    %592 = vmatpush.msra.mxu0 %v530
    %593 = vmatpush.msra.mxu0 %v528
    %594 = vmatpush.msra.mxu0 %v526
    %595 = vmatpush.msra.mxu0 %v524
    %596 = vmatpush.msra.mxu0 %v522
    %597 = vmatmul.f32.gmra.mxu0 %v308
    %v598 = vpop.f32.mrf.mxu0
    %v599 = vadd.f32 %v579, %v598
    %600 = vdwg.mxu0
    %601 = vmatpush.msra.mxu0 %v521
    %602 = vmatpush.msra.mxu0 %v519
    %603 = vmatpush.msra.mxu0 %v517
    %604 = vmatpush.msra.mxu0 %v515
    %605 = vmatpush.msra.mxu0 %v513
    %606 = vmatpush.msra.mxu0 %v511
    %607 = vmatpush.msra.mxu0 %v509
    %608 = vmatpush.msra.mxu0 %v507
    %609 = vmatpush.msra.mxu0 %v505
    %610 = vmatpush.msra.mxu0 %v503
    %611 = vmatpush.msra.mxu0 %v501
    %612 = vmatpush.msra.mxu0 %v499
    %613 = vmatpush.msra.mxu0 %v497
    %614 = vmatpush.msra.mxu0 %v495
    %615 = vmatpush.msra.mxu0 %v493
    %616 = vmatpush.msra.mxu0 %v491
    %617 = vmatmul.f32.gmra.mxu0 %v307
    %v618 = vpop.f32.mrf.mxu0
    %v619 = vadd.f32 %v558, %v618
    %620 = vdwg.mxu0
    %621 = vmatpush.msra.mxu0 %v553
    %622 = vmatpush.msra.mxu0 %v551
    %623 = vmatpush.msra.mxu0 %v549
    %624 = vmatpush.msra.mxu0 %v547
    %625 = vmatpush.msra.mxu0 %v545
    %626 = vmatpush.msra.mxu0 %v543
    %627 = vmatpush.msra.mxu0 %v541
    %628 = vmatpush.msra.mxu0 %v539
    %629 = vmatpush.msra.mxu0 %v537
    %630 = vmatpush.msra.mxu0 %v535
    %631 = vmatpush.msra.mxu0 %v533
    %632 = vmatpush.msra.mxu0 %v531
    %633 = vmatpush.msra.mxu0 %v529
    %634 = vmatpush.msra.mxu0 %v527
    %635 = vmatpush.msra.mxu0 %v525
    %636 = vmatpush.msra.mxu0 %v523
    %637 = vmatmul.f32.gmra.mxu0 %v308
    %v638 = vpop.f32.mrf.mxu0
    %v639 = vadd.f32 %v619, %v638
    %640 = vdwg.mxu0
    %v641 = vmax.f32 %v599, 0.0
    %v642 = vmax.f32 %v639, 0.0
    %s643 = scalar_lea.vmem [#allocation7], 2
    %v644 = vld [vmem:[%s643] sm:$0x3]
    %v646 = vperm.slane %v644, 0
    %v647 = vperm.slane %v644, 1
    %v650 = vmul.f32 %v641, %v646
    %v651 = vmul.f32 %v642, %v647
    %v652 = vadd.f32 %v650, %v651
    %653 = vadd.xlane.f32.xlu0 %v652
    %v654 = vpop.xlane.xlu0 %653
    %s655 = scalar_lea.vmem %s8, 1
    %v656 = vld [vmem:[%s655] sm:$0x1]
    %v658 = vperm.slane %v656, 0
    %v660 = vadd.f32 %v654, %v658
    %vm661 = vcmp.eq.s32.totalorder %v310, 1
    %v662 = vsel %vm661, 1, 0
    %vm663 = vcmp.eq.s32.totalorder %v662, 1
    %665 = vset.pattern.permute.xlu0 0
    %666 = vperm.xlu0 %665, %v660
    %v667 = vpop.permute.xlu0 %666
    %v669 = vsel %vm663, %v667, 0.0
    %v670 = vadd.f32 %v488, %v669
    %vm671 = vcmask 15360
    %672 = vst.msk [vmem:[%s9] sm:$0xff] %vm671, %v670
    // Predicated region
    $region54: #{tpu_custom_call.1} parent=1 // pred_check
      _
    $region55: #{tpu_custom_call.1} parent=1 // pred_check_branch
      %674 = sbr.rel (0) target = $region57
    $region56: #{tpu_custom_call.1} parent=1 // pred_region
      _
    $region57: #{tpu_custom_call.1} parent=1 // pred_fallthru
      _
    // Predicated region
    $region58: #{tpu_custom_call.1} parent=1 // pred_check
      _
    $region59: #{tpu_custom_call.1} parent=1 // pred_check_branch
      %676 = sbr.rel (0) target = $region61
    $region60: #{tpu_custom_call.1} parent=1 // pred_region
      _
    $region61: #{tpu_custom_call.1} parent=1 // pred_fallthru
      _
    %677 = vsyncpa [#allocation3], 1
    %678 = vsyncpa [#allocation5], 1
    %679 = vsyncpa [#allocation8], 1

</llo_original>
